<compile_context>
chip_gen: v7x
topology: tpu7x:2x2x1
jax: 0.10.0
libtpu: 0.0.40
codegen_flags: <defaults>
</compile_context>

<pallas_src>
import functools

import jax
import jax.numpy as jnp
from jax.experimental import pallas as pl
from jax.experimental.pallas import tpu as pltpu

_SOFTPLUS_THRESHOLD = 20.0


def _mish_kernel(x_ref, o_ref):
    x = x_ref[...]
    xf = x.astype(jnp.float32)
    # mish(x) = x * tanh(softplus(x)).  With t = exp(x):
    #   tanh(softplus(x)) = ((1+t)^2 - 1) / ((1+t)^2 + 1) = t(t+2) / (t(t+2) + 2)
    t = jnp.exp(jnp.minimum(xf, _SOFTPLUS_THRESHOLD))
    num = t * (t + 2.0)
    den = num + 2.0                       # den >= 2, always safe
    r = pl.reciprocal(den, approx=True)   # EUP approx reciprocal
    r = r * (2.0 - den * r)               # one Newton step (VALU) -> ~full f32 precision
    y = xf * num * r
    # PyTorch softplus(beta=1, threshold=20): for x > 20 softplus(x) == x and
    # tanh(x) == 1 in f32, so mish(x) == x exactly.
    y = jnp.where(xf > _SOFTPLUS_THRESHOLD, xf, y)
    o_ref[...] = y.astype(o_ref.dtype)


@functools.lru_cache(maxsize=None)
def _device_tuning():
    """Returns (target_block_bytes, vmem_limit_bytes or None) per TPU generation."""
    kind = ""
    try:
        kind = jax.devices()[0].device_kind.lower()
    except Exception:
        pass
    if "v7" in kind or "7x" in kind:
        # v7x: ~3.2 TB/s HBM per TC, 64 MiB physical VMEM -> big blocks,
        # raise the scoped-VMEM limit explicitly (4 double-buffered slabs).
        block_bytes, vmem_limit = 8 << 20, 48 << 20
    elif "v6" in kind:
        # v6e: 4 MiB blocks => 16 MiB double-buffered, inside 32 MiB default.
        block_bytes, vmem_limit = 4 << 20, None
    else:
        # v5e and unknown generations: 2 MiB blocks, inside 16 MiB default.
        block_bytes, vmem_limit = 2 << 20, None
    if vmem_limit is not None:
        try:
            cap = pltpu.get_tpu_info().vmem_capacity_bytes
            vmem_limit = min(vmem_limit, int(cap) * 3 // 4)
        except Exception:
            pass
    return block_bytes, vmem_limit


def mish(x: jax.Array, *, target_block_bytes=None) -> jax.Array:
    """Elementwise Mish. Accepts any shape / float dtype; returns same shape/dtype."""
    orig_shape = x.shape
    orig_dtype = x.dtype
    n = x.size
    if n == 0:
        return x
    itemsize = jnp.dtype(orig_dtype).itemsize
    pack = max(1, 4 // itemsize)          # elements packed per 32-bit sublane word
    sub = 8 * pack                        # native sublane tile: 8 f32 / 16 bf16 / 32 int8

    block_bytes, vmem_limit = _device_tuning()
    if target_block_bytes is not None:
        block_bytes = target_block_bytes

    # --- choose a lane-dense 2D slab (rows, cols): prefer wide cols, no pad ---
    cols = None
    for c in (2048, 1024, 512, 256, 128):
        if n % c == 0:
            cols = c
            break

    if cols is None:
        # n is not a multiple of 128.
        # Small arrays: one full-extent block (always legal) — no pad, no
        # trailing slice, no extra HBM passes.  Footprint accounts for the
        # (sublane, lane) tile padding of the last two dims.
        shape2 = orig_shape if x.ndim >= 2 else (1, max(n, 1))
        lead = 1
        for d in shape2[:-2]:
            lead *= int(d)
        lane = -(-int(shape2[-1]) // 128) * 128
        subl = -(-int(shape2[-2]) // sub) * sub
        footprint = lead * subl * lane * itemsize
        if footprint <= (1 << 20):        # <= 1 MiB per buffer: fits VMEM everywhere
            out = pl.pallas_call(
                _mish_kernel,
                out_shape=jax.ShapeDtypeStruct(shape2, orig_dtype),
            )(x.reshape(shape2))
            return out.reshape(orig_shape)
        # Large awkward arrays (rare): pad once to a tileable slab.
        # TODO(synk): mask the tail in-kernel (scalar-prefetch the true length)
        # to drop the extra pad/slice HBM passes for large non-128-multiple inputs.
        cols = 512
        padded_n = -(-n // (sub * cols)) * (sub * cols)
        x_flat = jnp.pad(jnp.ravel(x), (0, padded_n - n))
    else:
        padded_n = n
        x_flat = jnp.ravel(x)

    rows = padded_n // cols
    x2d = x_flat.reshape(rows, cols)
    total_bytes = padded_n * itemsize

    # --- row tile: ~block_bytes per block buffer, multiple of the sublane tile ---
    tr = max(sub, (block_bytes // (cols * itemsize)) // sub * sub)
    if tr >= rows:
        tr = rows                          # single full-extent block along rows
        # v7x has 2 TensorCores: split big single-block slabs into >= 2 grid
        # steps so the "parallel" row axis can be sharded across both cores.
        if total_bytes > (2 << 20) and rows >= 2 * sub:
            tr = -(-((rows + 1) // 2) // sub) * sub
    grid_rows = pl.cdiv(rows, tr)          # partial last block handled by Pallas

    cp_kwargs = dict(dimension_semantics=("parallel",))
    if vmem_limit is not None:
        cp_kwargs["vmem_limit_bytes"] = vmem_limit

    out2d = pl.pallas_call(
        _mish_kernel,
        out_shape=jax.ShapeDtypeStruct((rows, cols), orig_dtype),
        grid=(grid_rows,),
        in_specs=[pl.BlockSpec((tr, cols), lambda i: (i, 0))],
        out_specs=pl.BlockSpec((tr, cols), lambda i: (i, 0)),
        compiler_params=pltpu.CompilerParams(**cp_kwargs),
        cost_estimate=pl.CostEstimate(
            flops=6 * padded_n,
            transcendentals=2 * padded_n,
            bytes_accessed=2 * padded_n * itemsize),
    )(x2d)

    if padded_n == n:
        return out2d.reshape(orig_shape)
    return out2d.reshape(-1)[:n].reshape(orig_shape)


def mish_ref(x: jax.Array) -> jax.Array:
    xf = x.astype(jnp.float32)
    sp = jnp.where(xf > 20.0, xf, jnp.log1p(jnp.exp(jnp.minimum(xf, 20.0))))
    return (xf * jnp.tanh(sp)).astype(x.dtype)


if __name__ == "__main__":
    key = jax.random.PRNGKey(0)

    # NCHW, consistent with typical PyTorch conv-block inputs (size % 128 == 0:
    # wide-slab, zero-pad-free path).
    x = jax.random.normal(key, (2, 4, 16, 16), dtype=jnp.float32) * 3.0
    out = jax.block_until_ready(mish(x))
    ref = mish_ref(x)
    assert out.shape == x.shape and out.dtype == x.dtype
    assert jnp.allclose(out, ref, atol=1e-5, rtol=1e-4)

    # Awkward size (not a multiple of 128): exercises the no-pad whole-array path.
    x2 = jax.random.normal(jax.random.PRNGKey(1), (3, 5, 7), dtype=jnp.float32) * 5.0
    out2 = jax.block_until_ready(mish(x2))
    ref2 = mish_ref(x2)
    assert out2.shape == x2.shape and out2.dtype == x2.dtype
    assert jnp.allclose(out2, ref2, atol=1e-5, rtol=1e-4)

    # bf16 path: checks the dtype-aware (16-row) sublane rounding.
    x3 = (jax.random.normal(jax.random.PRNGKey(2), (4, 8, 32, 32)) * 3.0).astype(jnp.bfloat16)
    out3 = jax.block_until_ready(mish(x3))
    ref3 = mish_ref(x3)
    assert out3.shape == x3.shape and out3.dtype == x3.dtype
    assert jnp.allclose(out3.astype(jnp.float32), ref3.astype(jnp.float32),
                        atol=2e-2, rtol=2e-2)

    print("KERNEL_OK")
</pallas_src>

<mosaic_0001>
module attributes {stable_mosaic.version = 11 : i64} {
  func.func @_mish_kernel(%arg0: i32, %arg1: memref<1x2048xf32, #tpu.memory_space<vmem>>, %arg2: memref<1x2048xf32, #tpu.memory_space<vmem>>) attributes {dimension_semantics = [#tpu.dimension_semantics<parallel>], iteration_bounds = array<i64: 1>, scalar_prefetch = 0 : i64, scratch_operands = 0 : i64, tpu.core_type = #tpu.core_type<tc>, window_params = [{transform_indices = @transform_0, window_bounds = array<i64: 1, 2048>}, {transform_indices = @transform_1, window_bounds = array<i64: 1, 2048>}]} {
    %c0 = arith.constant 0 : index
    %c0_0 = arith.constant 0 : index
    %0 = vector.load %arg1[%c0, %c0_0] : memref<1x2048xf32, #tpu.memory_space<vmem>>, vector<1x2048xf32>
    %cst = arith.constant 2.000000e+01 : f32
    %1 = vector.broadcast %cst : f32 to vector<1x2048xf32>
    %2 = arith.minimumf %0, %1 : vector<1x2048xf32>
    %3 = math.exp %2 : vector<1x2048xf32>
    %cst_1 = arith.constant 2.000000e+00 : f32
    %4 = vector.broadcast %cst_1 : f32 to vector<1x2048xf32>
    %5 = arith.addf %3, %4 : vector<1x2048xf32>
    %6 = arith.mulf %3, %5 : vector<1x2048xf32>
    %cst_2 = arith.constant 2.000000e+00 : f32
    %7 = vector.broadcast %cst_2 : f32 to vector<1x2048xf32>
    %8 = arith.addf %6, %7 : vector<1x2048xf32>
    %9 = tpu.reciprocal %8 {approx = true} : vector<1x2048xf32> -> vector<1x2048xf32>
    %10 = arith.mulf %8, %9 : vector<1x2048xf32>
    %cst_3 = arith.constant 2.000000e+00 : f32
    %11 = vector.broadcast %cst_3 : f32 to vector<1x2048xf32>
    %12 = arith.subf %11, %10 : vector<1x2048xf32>
    %13 = arith.mulf %9, %12 : vector<1x2048xf32>
    %14 = arith.mulf %0, %6 : vector<1x2048xf32>
    %15 = arith.mulf %14, %13 : vector<1x2048xf32>
    %cst_4 = arith.constant 2.000000e+01 : f32
    %16 = vector.broadcast %cst_4 : f32 to vector<1x2048xf32>
    %17 = arith.cmpf ogt, %0, %16 : vector<1x2048xf32>
    %18 = arith.select %17, %0, %15 : vector<1x2048xi1>, vector<1x2048xf32>
    %c0_5 = arith.constant 0 : index
    %c0_6 = arith.constant 0 : index
    %19 = vector.load %arg2[%c0_5, %c0_6] : memref<1x2048xf32, #tpu.memory_space<vmem>>, vector<1x2048xf32>
    tpu.vector_store %arg2[%c0_5, %c0_6], %18 {strides = array<i32>} : memref<1x2048xf32, #tpu.memory_space<vmem>>, vector<1x2048xf32>,
    return
  }
  func.func @transform_0(%arg0: i32) -> (i32, i32) {
    %c0_i32 = arith.constant 0 : i32
    %c0_i32_0 = arith.constant 0 : i32
    return %arg0, %c0_i32 : i32, i32
  }
  func.func @transform_1(%arg0: i32) -> (i32, i32) {
    %c0_i32 = arith.constant 0 : i32
    %c0_i32_0 = arith.constant 0 : i32
    return %arg0, %c0_i32 : i32, i32
  }
}

</mosaic_0001>

<llo_original>
// kernel: tpu_custom_call.1
$region0: #{tpu_custom_call.1}
  #allocation0 [shape = 'u32[]', space=smem, size = 0x4, offset = 0x4, fixed_abs, tag = 'smem constant byte address 0x4 - core index']
  #allocation1 [shape = 'u32[144,128]{1,0:T(1,128)}', space=vmem, size = 0x12000, scoped, tag = 'internal scratch']
  %s0 = inlined_call_operand.hbm [shape: f32[1,2048], index: 0, kind: input, shape index: {}]
  %s1 = inlined_call_operand.hbm [shape: f32[1,2048], index: 1, kind: output, shape index: {}]
  %s2 = sld [smem:[#allocation0]]
  $region18: #{tpu_custom_call.1} parent=0
    _
  %s4 = ssub.s32 1, %s2
  %s5 = scalar_select 0, %s4, %s2
  $region1: #{tpu_custom_call.1} parent=0
    #allocation2 [shape = 'u8[8192]{0}', space=vmem, size = 0x2000, scoped, tag = 'input window, operand 0, single buffered']
    #allocation3 [shape = 's32[1]{0}', space=sflag, size = 0x4, scoped, tag = 'scoped memory for tpu_custom_call.1']
    #allocation4 [shape = 's32[1]{0}', space=sflag, size = 0x4, scoped, tag = 'scoped memory for tpu_custom_call.1']
    #allocation5 [shape = 'u8[8192]{0}', space=vmem, size = 0x2000, scoped, tag = 'output window, operand 0, single buffered']
    %6 = vsyncpa [#allocation3], 0
    %7 = vsyncpa [#allocation4], 0
    // Predicated region
    $region2: #{tpu_custom_call.1} parent=1 // pred_check
      _
    $region3: #{tpu_custom_call.1} parent=1 // pred_check_branch
      %9 = sbr.rel (0) target = $region5
    $region4: #{tpu_custom_call.1} parent=1 // pred_region
      %s11 = ssub.s32 256, 256
      %12 = vsyncadd [#allocation3], %s11
      %s14 = sshll.u32 [#allocation2], 4
      %s15 = int_to_ptr.vmem [resolvable:$true] %s14
      %17 = dma.hbm_to_vmem [thread:$0]  %s0, 256, %s15, [#allocation3]
    $region5: #{tpu_custom_call.1} parent=1 // pred_fallthru
      _
    // Predicated region
    $region6: #{tpu_custom_call.1} parent=1 // pred_check
      _
    $region7: #{tpu_custom_call.1} parent=1 // pred_check_branch
      %19 = sbr.rel (0) target = $region9
    $region8: #{tpu_custom_call.1} parent=1 // pred_region
      %20 = dma.done [#allocation3], 256
    $region9: #{tpu_custom_call.1} parent=1 // pred_fallthru
      _
    %v21 = vld [vmem:[#allocation2] sm:$0xff]
    %v22 = vld [vmem:[#allocation2 + $0x8] sm:$0xff]
    %v23 = vmin.f32 %v21, 20.0
    %v24 = vmin.f32 %v22, 20.0
    %v25 = vmul.f32 %v23, 1.442695
    %v26 = vpow.pop %v25
    %v27 = vmul.f32 %v24, 1.442695
    %v28 = vpow.pop %v27
    %v29 = vadd.f32 %v26, 2.0
    %v30 = vadd.f32 %v28, 2.0
    %v31 = vmul.f32 %v26, %v29
    %v32 = vmul.f32 %v28, %v30
    %v33 = vadd.f32 %v31, 2.0
    %v34 = vadd.f32 %v32, 2.0
    %v35 = vrcp.pop %v33
    %v36 = vrcp.pop %v34
    %v37 = vmul.f32 %v33, %v35
    %v38 = vmul.f32 %v34, %v36
    %v39 = vsub.f32 2.0, %v37
    %v40 = vsub.f32 2.0, %v38
    %v41 = vmul.f32 %v35, %v39
    %v42 = vmul.f32 %v36, %v40
    %v43 = vmul.f32 %v21, %v31
    %v44 = vmul.f32 %v22, %v32
    %v45 = vmul.f32 %v43, %v41
    %v46 = vmul.f32 %v44, %v42
    %vm47 = vcmp.gt.f32.partialorder %v21, 20.0
    %vm48 = vcmp.gt.f32.partialorder %v22, 20.0
    %v49 = vsel %vm47, %v21, %v45
    %v50 = vsel %vm48, %v22, %v46
    %51 = vst [vmem:[#allocation5] sm:$0xff] %v49
    %52 = vst [vmem:[#allocation5 + $0x8] sm:$0xff] %v50
    // Predicated region
    $region10: #{tpu_custom_call.1} parent=1 // pred_check
      _
    $region11: #{tpu_custom_call.1} parent=1 // pred_check_branch
      %54 = sbr.rel (0) target = $region13
    $region12: #{tpu_custom_call.1} parent=1 // pred_region
      %s56 = ssub.s32 256, 256
      %57 = vsyncadd [#allocation4], %s56
      %s59 = sshll.u32 [#allocation5], 4
      %s60 = int_to_ptr.vmem [resolvable:$true] %s59
      %62 = dma.vmem_to_hbm [thread:$0]  %s60, 256, %s1, [#allocation4]
    $region13: #{tpu_custom_call.1} parent=1 // pred_fallthru
      _
    // Predicated region
    $region14: #{tpu_custom_call.1} parent=1 // pred_check
      _
    $region15: #{tpu_custom_call.1} parent=1 // pred_check_branch
      %64 = sbr.rel (0) target = $region17
    $region16: #{tpu_custom_call.1} parent=1 // pred_region
      %65 = dma.done [#allocation4], 256
    $region17: #{tpu_custom_call.1} parent=1 // pred_fallthru
      _
    %66 = vsyncpa [#allocation3], 1
    %67 = vsyncpa [#allocation4], 1

</llo_original>
